<compile_context>
chip_gen: v5e
topology: v5e:2x2
jax: 0.10.0
libtpu: 0.0.40
codegen_flags: <defaults>
</compile_context>

<pallas_src>
import functools
import math

import jax
import jax.numpy as jnp
from jax import lax
from jax.experimental import pallas as pl
from jax.experimental.pallas import tpu as pltpu


# ------------------------------ tile helpers --------------------------------

def _pick_sub_tile(dim, target):
    """Largest power-of-two tile <= target that divides dim and is >= 8,
    otherwise the full dim (sublane axis: multiple of 8 or full)."""
    t = target
    while t >= 8 and dim % t != 0:
        t //= 2
    return t if (t >= 8 and dim % t == 0) else dim


def _pick_lane_tile(dim, target):
    """Largest power-of-two tile <= target that divides dim and is >= 128,
    otherwise the full dim (lane axis: multiple of 128 or full)."""
    t = target
    while t >= 128 and dim % t != 0:
        t //= 2
    return t if (t >= 128 and dim % t == 0) else dim


# ----------------------------- linear kernels -------------------------------

def _linear_kernel(x_ref, w_ref, b_ref, o_ref, acc_ref, *, activation):
    @pl.when(pl.program_id(2) == 0)
    def _():
        acc_ref[...] = jnp.zeros_like(acc_ref)

    # bf16 MXU operands, f32 accumulation.
    acc_ref[...] += jnp.dot(x_ref[...].astype(jnp.bfloat16), w_ref[...],
                            preferred_element_type=jnp.float32)

    @pl.when(pl.program_id(2) == pl.num_programs(2) - 1)
    def _():
        y = acc_ref[...] + b_ref[...].astype(jnp.float32)
        if activation == "relu":
            y = jnp.maximum(y, 0.0)
        o_ref[...] = y.astype(o_ref.dtype)


def linear(x, w, b, activation=None):
    """x: (M, K) f32 @ w: (K, N) bf16 + b: (N,) f32 -> (M, N) f32."""
    M, K = x.shape
    N = w.shape[1]
    tm = M if M <= 512 else _pick_sub_tile(M, 512)   # stream weights fewer times
    tn = _pick_lane_tile(N, 256)
    tk = _pick_lane_tile(K, 512)
    grid = (M // tm, N // tn, K // tk)
    kern = functools.partial(_linear_kernel, activation=activation)
    return pl.pallas_call(
        kern,
        grid=grid,
        out_shape=jax.ShapeDtypeStruct((M, N), jnp.float32),
        in_specs=[
            pl.BlockSpec((tm, tk), lambda i, j, k: (i, k)),
            pl.BlockSpec((tk, tn), lambda i, j, k: (k, j)),
            pl.BlockSpec((1, tn), lambda i, j, k: (0, j)),
        ],
        out_specs=pl.BlockSpec((tm, tn), lambda i, j, k: (i, j)),
        scratch_shapes=[pltpu.VMEM((tm, tn), jnp.float32)],
        compiler_params=pltpu.CompilerParams(
            dimension_semantics=("parallel", "parallel", "arbitrary")),
    )(x, w, b.reshape(1, N))


def _linear_res_ln_kernel(x_ref, w_ref, b_ref, r_ref, g_ref, bb_ref, o_ref,
                          acc_ref):
    @pl.when(pl.program_id(1) == 0)
    def _():
        acc_ref[...] = jnp.zeros_like(acc_ref)

    acc_ref[...] += jnp.dot(x_ref[...].astype(jnp.bfloat16), w_ref[...],
                            preferred_element_type=jnp.float32)

    @pl.when(pl.program_id(1) == pl.num_programs(1) - 1)
    def _():
        # bias + residual + LayerNorm fused into the matmul epilogue (f32 math).
        y = (acc_ref[...] + b_ref[...].astype(jnp.float32)
             + r_ref[...].astype(jnp.float32))
        d = y.shape[-1]
        s1 = jnp.sum(y, axis=-1, keepdims=True)
        s2 = jnp.sum(y * y, axis=-1, keepdims=True)
        mu = s1 * (1.0 / d)
        var = s2 * (1.0 / d) - mu * mu
        yn = (y - mu) * lax.rsqrt(var + 1e-5)
        o_ref[...] = (yn * g_ref[...].astype(jnp.float32)
                      + bb_ref[...].astype(jnp.float32)).astype(o_ref.dtype)


def linear_res_ln(x, w, b, res, gamma, beta):
    """LayerNorm(x @ w + b + res) with the residual-add + LN fused into the
    final-k epilogue (full-N output block so LN sees whole rows)."""
    M, K = x.shape
    N = w.shape[1]
    tm = M if M <= 512 else _pick_sub_tile(M, 512)
    tk = _pick_lane_tile(K, 512)
    grid = (M // tm, K // tk)
    return pl.pallas_call(
        _linear_res_ln_kernel,
        grid=grid,
        out_shape=jax.ShapeDtypeStruct((M, N), jnp.float32),
        in_specs=[
            pl.BlockSpec((tm, tk), lambda i, k: (i, k)),
            pl.BlockSpec((tk, N), lambda i, k: (k, 0)),
            pl.BlockSpec((1, N), lambda i, k: (0, 0)),
            pl.BlockSpec((tm, N), lambda i, k: (i, 0)),
            pl.BlockSpec((1, N), lambda i, k: (0, 0)),
            pl.BlockSpec((1, N), lambda i, k: (0, 0)),
        ],
        out_specs=pl.BlockSpec((tm, N), lambda i, k: (i, 0)),
        scratch_shapes=[pltpu.VMEM((tm, N), jnp.float32)],
        compiler_params=pltpu.CompilerParams(
            dimension_semantics=("parallel", "arbitrary")),
    )(x, w, b.reshape(1, N), res, gamma.reshape(1, N), beta.reshape(1, N))


# ---------------------------- attention kernels ------------------------------

def _softmax_rows(s, *, exact):
    s = s - jnp.max(s, axis=-1, keepdims=True)
    e = jnp.exp(s)
    denom = jnp.sum(e, axis=-1, keepdims=True)
    if exact:
        return e / denom                 # exact (returned attention weights)
    return e * pl.reciprocal(denom, approx=True)   # EUP path


def _head_attn(q, k, v, keep, scale, *, exact):
    """q:(Sq,Dh) k/v:(Sk,Dh) f32; returns (o f32 (Sq,Dh), p f32 (Sq,Sk))."""
    s = lax.dot_general(q.astype(jnp.bfloat16), k.astype(jnp.bfloat16),
                        (((1,), (1,)), ((), ())),
                        preferred_element_type=jnp.float32) * scale
    s = jnp.where(keep, s, -1e10)
    p = _softmax_rows(s, exact=exact)
    o = lax.dot_general(p.astype(jnp.bfloat16), v.astype(jnp.bfloat16),
                        (((1,), (0,)), ((), ())),
                        preferred_element_type=jnp.float32)
    return o, p


def _mha_self_kernel(qkv_ref, m_ref, o_ref, *, d_model, n_heads, scale, causal):
    dh = d_model // n_heads
    qkv = qkv_ref[0]                               # (S, 3D) f32
    keep = m_ref[0] > 0.0                          # (1, S) key-valid
    if causal:
        S = qkv.shape[0]
        qi = lax.broadcasted_iota(jnp.int32, (S, S), 0)
        ki = lax.broadcasted_iota(jnp.int32, (S, S), 1)
        keep = jnp.logical_and(keep, ki <= qi)
    outs = []
    for h in range(n_heads):
        q = qkv[:, h * dh:(h + 1) * dh]
        k = qkv[:, d_model + h * dh:d_model + (h + 1) * dh]
        v = qkv[:, 2 * d_model + h * dh:2 * d_model + (h + 1) * dh]
        o, _ = _head_attn(q, k, v, keep, scale, exact=False)
        outs.append(o)
    # single lane-dense (S, D) store
    o_ref[0] = jnp.concatenate(outs, axis=-1).astype(o_ref.dtype)


def _mha_cross_kernel(q_ref, kv_ref, m_ref, o_ref, *, d_model, n_heads, scale):
    dh = d_model // n_heads
    qm = q_ref[0]                                  # (Sq, D)
    kvm = kv_ref[0]                                # (Sk, 2D)
    keep = m_ref[0] > 0.0
    outs = []
    for h in range(n_heads):
        q = qm[:, h * dh:(h + 1) * dh]
        k = kvm[:, h * dh:(h + 1) * dh]
        v = kvm[:, d_model + h * dh:d_model + (h + 1) * dh]
        o, _ = _head_attn(q, k, v, keep, scale, exact=False)
        outs.append(o)
    o_ref[0] = jnp.concatenate(outs, axis=-1).astype(o_ref.dtype)


def _mha_cross_kernel_w(q_ref, kv_ref, m_ref, o_ref, a_ref, *, d_model,
                        n_heads, scale):
    dh = d_model // n_heads
    qm = q_ref[0]
    kvm = kv_ref[0]
    keep = m_ref[0] > 0.0
    outs = []
    for h in range(n_heads):
        q = qm[:, h * dh:(h + 1) * dh]
        k = kvm[:, h * dh:(h + 1) * dh]
        v = kvm[:, d_model + h * dh:d_model + (h + 1) * dh]
        # exact softmax division: these weights are returned to the caller.
        o, p = _head_attn(q, k, v, keep, scale, exact=True)
        a_ref[0, h] = p.astype(a_ref.dtype)
        outs.append(o)
    o_ref[0] = jnp.concatenate(outs, axis=-1).astype(o_ref.dtype)


def mha_self(qkv, kmask, *, n_heads, d_model, causal):
    """qkv: (B, S, 3D) fused projection; kmask: (B, S) bool key-valid."""
    B, S, threeD = qkv.shape
    kmask3 = kmask.reshape(B, 1, S).astype(jnp.float32)
    kern = functools.partial(_mha_self_kernel, d_model=d_model,
                             n_heads=n_heads,
                             scale=1.0 / math.sqrt(d_model // n_heads),
                             causal=causal)
    return pl.pallas_call(
        kern,
        grid=(B,),
        out_shape=jax.ShapeDtypeStruct((B, S, d_model), jnp.float32),
        in_specs=[
            pl.BlockSpec((1, S, threeD), lambda b: (b, 0, 0)),
            pl.BlockSpec((1, 1, S), lambda b: (b, 0, 0)),
        ],
        out_specs=pl.BlockSpec((1, S, d_model), lambda b: (b, 0, 0)),
        compiler_params=pltpu.CompilerParams(dimension_semantics=("parallel",)),
    )(qkv, kmask3)


def mha_cross(q, kv, kmask, *, n_heads, d_model, need_weights):
    """q: (B, Sq, D); kv: (B, Sk, 2D) fused K/V; kmask: (B, Sk) bool."""
    B, Sq, D = q.shape
    Sk = kv.shape[1]
    kmask3 = kmask.reshape(B, 1, Sk).astype(jnp.float32)
    scale = 1.0 / math.sqrt(d_model // n_heads)
    in_specs = [
        pl.BlockSpec((1, Sq, D), lambda b: (b, 0, 0)),
        pl.BlockSpec((1, Sk, 2 * D), lambda b: (b, 0, 0)),
        pl.BlockSpec((1, 1, Sk), lambda b: (b, 0, 0)),
    ]
    cparams = pltpu.CompilerParams(dimension_semantics=("parallel",))
    if need_weights:
        out, attn = pl.pallas_call(
            functools.partial(_mha_cross_kernel_w, d_model=d_model,
                              n_heads=n_heads, scale=scale),
            grid=(B,),
            out_shape=(
                jax.ShapeDtypeStruct((B, Sq, D), jnp.float32),
                jax.ShapeDtypeStruct((B, n_heads, Sq, Sk), jnp.float32),
            ),
            in_specs=in_specs,
            out_specs=(
                pl.BlockSpec((1, Sq, D), lambda b: (b, 0, 0)),
                pl.BlockSpec((1, n_heads, Sq, Sk), lambda b: (b, 0, 0, 0)),
            ),
            compiler_params=cparams,
        )(q, kv, kmask3)
        return out, attn
    out = pl.pallas_call(
        functools.partial(_mha_cross_kernel, d_model=d_model,
                          n_heads=n_heads, scale=scale),
        grid=(B,),
        out_shape=jax.ShapeDtypeStruct((B, Sq, D), jnp.float32),
        in_specs=in_specs,
        out_specs=pl.BlockSpec((1, Sq, D), lambda b: (b, 0, 0)),
        compiler_params=cparams,
    )(q, kv, kmask3)
    return out, None


# --------------------------- model building blocks --------------------------

def self_attn_block(p, x, kmask, ln_g, ln_b, *, causal):
    B, S, D = x.shape
    qkv = linear(x.reshape(B * S, D), p["w_qkv"], p["b_qkv"]).reshape(B, S, 3 * D)
    ctx = mha_self(qkv, kmask, n_heads=p["n_heads"], d_model=D, causal=causal)
    out = linear_res_ln(ctx.reshape(B * S, D), p["wo"], p["bo"],
                        x.reshape(B * S, D), ln_g, ln_b)
    return out.reshape(B, S, D)


def cross_attn_block(p, x, enc, kmask, ln_g, ln_b, *, need_weights):
    B, Sq, D = x.shape
    Sk = enc.shape[1]
    q = linear(x.reshape(B * Sq, D), p["w_q"], p["b_q"]).reshape(B, Sq, D)
    kv = linear(enc.reshape(B * Sk, D), p["w_kv"], p["b_kv"]).reshape(B, Sk, 2 * D)
    ctx, attn = mha_cross(q, kv, kmask, n_heads=p["n_heads"], d_model=D,
                          need_weights=need_weights)
    out = linear_res_ln(ctx.reshape(B * Sq, D), p["wo"], p["bo"],
                        x.reshape(B * Sq, D), ln_g, ln_b)
    return out.reshape(B, Sq, D), attn


def ffn_block(p, x, ln_g, ln_b):
    B, S, D = x.shape
    h = linear(x.reshape(B * S, D), p["w1"], p["b1"], activation="relu")
    out = linear_res_ln(h, p["w2"], p["b2"], x.reshape(B * S, D), ln_g, ln_b)
    return out.reshape(B, S, D)


def encoder_forward(p, x, x_kmask):
    B, S = x.shape
    D = p["d_model"]
    # TODO(synk): token-embedding gather left to XLA (no clean Pallas gather here).
    h = jnp.take(p["tok_emb"], x, axis=0) * math.sqrt(D) + p["pos_emb"][None, :S]
    for layer in p["layers"]:
        h = self_attn_block(layer["self_attn"], h, x_kmask,
                            layer["ln1_g"], layer["ln1_b"], causal=False)
        h = ffn_block(layer["ffn"], h, layer["ln2_g"], layer["ln2_b"])
    return h


def decoder_forward(p, y, y_kmask, enc_x, x_kmask):
    B, S = y.shape
    D = p["d_model"]
    h = jnp.take(p["tok_emb"], y, axis=0) * math.sqrt(D) + p["pos_emb"][None, :S]
    attention = None
    n_layers = len(p["layers"])
    for li, layer in enumerate(p["layers"]):
        h = self_attn_block(layer["self_attn"], h, y_kmask,
                            layer["ln1_g"], layer["ln1_b"], causal=True)
        # only the last layer's cross-attention weights are returned (per-head,
        # like the from-scratch PyTorch decoder); earlier layers skip the
        # O(S^2) probability writeback entirely.
        need_w = li == n_layers - 1
        h, attn = cross_attn_block(layer["cross_attn"], h, enc_x, x_kmask,
                                   layer["ln2_g"], layer["ln2_b"],
                                   need_weights=need_w)
        if need_w:
            attention = attn
        h = ffn_block(layer["ffn"], h, layer["ln3_g"], layer["ln3_b"])
    out = linear(h.reshape(B * S, D), p["w_out"], p["b_out"]).reshape(B, S, -1)
    return out, attention


def transformer_forward(params, x, y):
    """Mirrors Transformer.forward: pad masks (key-valid vectors) + in-kernel
    causal masking for the decoder self-attention."""
    x_kmask = x != params["x_pad_idx"]          # (B, Sx) key-valid
    y_kmask = y != params["y_pad_idx"]          # (B, Sy) key-valid
    enc = encoder_forward(params["encoder"], x, x_kmask)
    out, attention = decoder_forward(params["decoder"], y, y_kmask, enc, x_kmask)
    return out, attention


# ------------------------------ parameter init ------------------------------

def _self_attn_params(key, d_model, n_heads):
    ks = jax.random.split(key, 4)

    def lin(k):
        return 0.02 * jax.random.normal(k, (d_model, d_model), jnp.float32)

    wq, wk, wv, wo = lin(ks[0]), lin(ks[1]), lin(ks[2]), lin(ks[3])
    return {
        "n_heads": n_heads,
        # fused QKV projection, stored bf16 once at init (MXU operand dtype)
        "w_qkv": jnp.concatenate([wq, wk, wv], axis=1).astype(jnp.bfloat16),
        "b_qkv": jnp.zeros((3 * d_model,), jnp.float32),
        "wo": wo.astype(jnp.bfloat16),
        "bo": jnp.zeros((d_model,), jnp.float32),
    }


def _cross_attn_params(key, d_model, n_heads):
    ks = jax.random.split(key, 4)

    def lin(k):
        return 0.02 * jax.random.normal(k, (d_model, d_model), jnp.float32)

    wq, wk, wv, wo = lin(ks[0]), lin(ks[1]), lin(ks[2]), lin(ks[3])
    return {
        "n_heads": n_heads,
        "w_q": wq.astype(jnp.bfloat16),
        "b_q": jnp.zeros((d_model,), jnp.float32),
        # fused K/V projection of the encoder memory
        "w_kv": jnp.concatenate([wk, wv], axis=1).astype(jnp.bfloat16),
        "b_kv": jnp.zeros((2 * d_model,), jnp.float32),
        "wo": wo.astype(jnp.bfloat16),
        "bo": jnp.zeros((d_model,), jnp.float32),
    }


def _ffn_params(key, d_model, d_ff):
    k1, k2 = jax.random.split(key)
    return {
        "w1": (0.02 * jax.random.normal(k1, (d_model, d_ff), jnp.float32)
               ).astype(jnp.bfloat16),
        "b1": jnp.zeros((d_ff,), jnp.float32),
        "w2": (0.02 * jax.random.normal(k2, (d_ff, d_model), jnp.float32)
               ).astype(jnp.bfloat16),
        "b2": jnp.zeros((d_model,), jnp.float32),
    }


def init_params(key, *, vocab_x, vocab_y, max_len, d_model, n_heads, d_ff,
                n_layers, x_pad_idx, y_pad_idx):
    keys = jax.random.split(key, 6 + 8 * n_layers)
    it = iter(keys)
    enc_layers = []
    for _ in range(n_layers):
        enc_layers.append({
            "self_attn": _self_attn_params(next(it), d_model, n_heads),
            "ffn": _ffn_params(next(it), d_model, d_ff),
            "ln1_g": jnp.ones((d_model,), jnp.float32),
            "ln1_b": jnp.zeros((d_model,), jnp.float32),
            "ln2_g": jnp.ones((d_model,), jnp.float32),
            "ln2_b": jnp.zeros((d_model,), jnp.float32),
        })
    dec_layers = []
    for _ in range(n_layers):
        dec_layers.append({
            "self_attn": _self_attn_params(next(it), d_model, n_heads),
            "cross_attn": _cross_attn_params(next(it), d_model, n_heads),
            "ffn": _ffn_params(next(it), d_model, d_ff),
            "ln1_g": jnp.ones((d_model,), jnp.float32),
            "ln1_b": jnp.zeros((d_model,), jnp.float32),
            "ln2_g": jnp.ones((d_model,), jnp.float32),
            "ln2_b": jnp.zeros((d_model,), jnp.float32),
            "ln3_g": jnp.ones((d_model,), jnp.float32),
            "ln3_b": jnp.zeros((d_model,), jnp.float32),
        })
    encoder = {
        "d_model": d_model,
        "tok_emb": 0.02 * jax.random.normal(next(it), (vocab_x, d_model), jnp.float32),
        "pos_emb": 0.02 * jax.random.normal(next(it), (max_len, d_model), jnp.float32),
        "layers": enc_layers,
    }
    decoder = {
        "d_model": d_model,
        "tok_emb": 0.02 * jax.random.normal(next(it), (vocab_y, d_model), jnp.float32),
        "pos_emb": 0.02 * jax.random.normal(next(it), (max_len, d_model), jnp.float32),
        "layers": dec_layers,
        "w_out": (0.02 * jax.random.normal(next(it), (d_model, vocab_y), jnp.float32)
                  ).astype(jnp.bfloat16),
        "b_out": jnp.zeros((vocab_y,), jnp.float32),
    }
    return {"encoder": encoder, "decoder": decoder,
            "x_pad_idx": x_pad_idx, "y_pad_idx": y_pad_idx}


# ----------------------------------- main -----------------------------------

if __name__ == "__main__":
    B, Sx, Sy = 2, 8, 8
    d_model, n_heads, d_ff, n_layers = 32, 4, 64, 2
    vocab_x, vocab_y = 16, 16
    x_pad_idx, y_pad_idx = 0, 0

    key = jax.random.PRNGKey(0)
    kp, kx, ky = jax.random.split(key, 3)
    params = init_params(kp, vocab_x=vocab_x, vocab_y=vocab_y, max_len=32,
                         d_model=d_model, n_heads=n_heads, d_ff=d_ff,
                         n_layers=n_layers, x_pad_idx=x_pad_idx,
                         y_pad_idx=y_pad_idx)

    x = jax.random.randint(kx, (B, Sx), 1, vocab_x, dtype=jnp.int32)
    y = jax.random.randint(ky, (B, Sy), 1, vocab_y, dtype=jnp.int32)
    # introduce some padding to exercise the pad masks
    x = x.at[0, 6:].set(x_pad_idx)
    y = y.at[1, 5:].set(y_pad_idx)

    out, attention = transformer_forward(params, x, y)
    jax.block_until_ready((out, attention))

    assert out.shape == (B, Sy, vocab_y)
    assert attention.shape == (B, n_heads, Sy, Sx)
    assert bool(jnp.all(jnp.isfinite(out))) and bool(jnp.all(jnp.isfinite(attention)))
    print("KERNEL_OK")
</pallas_src>

<mosaic_0001>
module attributes {stable_mosaic.version = 11 : i64} {
  func.func @_linear_kernel(%arg0: i32, %arg1: i32, %arg2: i32, %arg3: memref<16x32xf32, #tpu.memory_space<vmem>>, %arg4: memref<32x96xbf16, #tpu.memory_space<vmem>>, %arg5: memref<1x96xf32, #tpu.memory_space<vmem>>, %arg6: memref<16x96xf32, #tpu.memory_space<vmem>>, %arg7: memref<16x96xf32, #tpu.memory_space<vmem>>) attributes {dimension_semantics = [#tpu.dimension_semantics<parallel>, #tpu.dimension_semantics<parallel>, #tpu.dimension_semantics<arbitrary>], iteration_bounds = array<i64: 1, 1, 1>, scalar_prefetch = 0 : i64, scratch_operands = 1 : i64, tpu.core_type = #tpu.core_type<tc>, window_params = [{transform_indices = @transform_0, window_bounds = array<i64: 16, 32>}, {transform_indices = @transform_1, window_bounds = array<i64: 32, 96>}, {transform_indices = @transform_2, window_bounds = array<i64: 1, 96>}, {transform_indices = @transform_3, window_bounds = array<i64: 16, 96>}]} {
    %c0_i32 = arith.constant 0 : i32
    %0 = arith.cmpi eq, %arg2, %c0_i32 : i32
    %1 = arith.extui %0 : i1 to i32
    %c0_i32_0 = arith.constant 0 : i32
    %2 = arith.cmpi ne, %1, %c0_i32_0 : i32
    scf.if %2 {
      %cst_10 = arith.constant 0.000000e+00 : f32
      %13 = vector.broadcast %cst_10 : f32 to vector<16x96xf32>
      %c0_11 = arith.constant 0 : index
      %c0_12 = arith.constant 0 : index
      %14 = vector.load %arg7[%c0_11, %c0_12] : memref<16x96xf32, #tpu.memory_space<vmem>>, vector<16x96xf32>
      tpu.vector_store %arg7[%c0_11, %c0_12], %13 {strides = array<i32>} : memref<16x96xf32, #tpu.memory_space<vmem>>, vector<16x96xf32>,
    } else {
    }
    %c0 = arith.constant 0 : index
    %c0_1 = arith.constant 0 : index
    %3 = vector.load %arg7[%c0, %c0_1] : memref<16x96xf32, #tpu.memory_space<vmem>>, vector<16x96xf32>
    %c0_2 = arith.constant 0 : index
    %c0_3 = arith.constant 0 : index
    %4 = vector.load %arg3[%c0_2, %c0_3] : memref<16x32xf32, #tpu.memory_space<vmem>>, vector<16x32xf32>
    %5 = arith.truncf %4 : vector<16x32xf32> to vector<16x32xbf16>
    %c0_4 = arith.constant 0 : index
    %c0_5 = arith.constant 0 : index
    %6 = vector.load %arg4[%c0_4, %c0_5] : memref<32x96xbf16, #tpu.memory_space<vmem>>, vector<32x96xbf16>
    %cst = arith.constant dense<0.000000e+00> : vector<16x96xf32>
    %7 = tpu.matmul %5, %6, %cst {dimension_numbers = #tpu.dot_dimension_numbers<[1], [0], [0], [1], [0, 0, 1, 1], [], []>} : vector<16x32xbf16>, vector<32x96xbf16>, vector<16x96xf32> -> vector<16x96xf32>
    %8 = arith.addf %3, %7 : vector<16x96xf32>
    %c0_6 = arith.constant 0 : index
    %c0_7 = arith.constant 0 : index
    %9 = vector.load %arg7[%c0_6, %c0_7] : memref<16x96xf32, #tpu.memory_space<vmem>>, vector<16x96xf32>
    tpu.vector_store %arg7[%c0_6, %c0_7], %8 {strides = array<i32>} : memref<16x96xf32, #tpu.memory_space<vmem>>, vector<16x96xf32>,
    %c0_i32_8 = arith.constant 0 : i32
    %10 = arith.cmpi eq, %arg2, %c0_i32_8 : i32
    %11 = arith.extui %10 : i1 to i32
    %c0_i32_9 = arith.constant 0 : i32
    %12 = arith.cmpi ne, %11, %c0_i32_9 : i32
    scf.if %12 {
      %c0_10 = arith.constant 0 : index
      %c0_11 = arith.constant 0 : index
      %13 = vector.load %arg7[%c0_10, %c0_11] : memref<16x96xf32, #tpu.memory_space<vmem>>, vector<16x96xf32>
      %c0_12 = arith.constant 0 : index
      %c0_13 = arith.constant 0 : index
      %14 = vector.load %arg5[%c0_12, %c0_13] : memref<1x96xf32, #tpu.memory_space<vmem>>, vector<1x96xf32>
      %15 = vector.broadcast %14 : vector<1x96xf32> to vector<16x96xf32>
      %16 = arith.addf %13, %15 : vector<16x96xf32>
      %c0_14 = arith.constant 0 : index
      %c0_15 = arith.constant 0 : index
      %17 = vector.load %arg6[%c0_14, %c0_15] : memref<16x96xf32, #tpu.memory_space<vmem>>, vector<16x96xf32>
      tpu.vector_store %arg6[%c0_14, %c0_15], %16 {strides = array<i32>} : memref<16x96xf32, #tpu.memory_space<vmem>>, vector<16x96xf32>,
    } else {
    }
    return
  }
  func.func @transform_0(%arg0: i32, %arg1: i32, %arg2: i32) -> (i32, i32) {
    %c0_i32 = arith.constant 0 : i32
    return %arg0, %arg2 : i32, i32
  }
  func.func @transform_1(%arg0: i32, %arg1: i32, %arg2: i32) -> (i32, i32) {
    %c0_i32 = arith.constant 0 : i32
    return %arg2, %arg1 : i32, i32
  }
  func.func @transform_2(%arg0: i32, %arg1: i32, %arg2: i32) -> (i32, i32) {
    %c0_i32 = arith.constant 0 : i32
    %c0_i32_0 = arith.constant 0 : i32
    return %c0_i32, %arg1 : i32, i32
  }
  func.func @transform_3(%arg0: i32, %arg1: i32, %arg2: i32) -> (i32, i32) {
    %c0_i32 = arith.constant 0 : i32
    return %arg0, %arg1 : i32, i32
  }
}

</mosaic_0001>

<llo_original>
// kernel: tpu_custom_call.1
$region0: #{tpu_custom_call.1}
  #allocation0 [shape = 'u32[]', space=smem, size = 0x4, offset = 0x4, fixed_abs, tag = 'smem constant byte address 0x4 - core index']
  #allocation1 [shape = 'u32[72,128]{1,0:T(1,128)}', space=vmem, size = 0x9000, scoped, tag = 'internal scratch']
  #allocation2 [shape = 'f32[16,96]{1,0:T(8,128)}', space=vmem, size = 0x2000, scoped, tag = 'scratch operand']
  %s0 = inlined_call_operand.hbm [shape: f32[16,32], index: 0, kind: input, shape index: {}]
  %s1 = inlined_call_operand.hbm [shape: bf16[32,96], index: 1, kind: input, shape index: {}]
  %s2 = inlined_call_operand.vmem [shape: f32[1,96], index: 2, kind: input, shape index: {}]
  %s3 = inlined_call_operand.hbm [shape: f32[16,96], index: 3, kind: output, shape index: {}]
  %s4 = sld [smem:[#allocation0]]
  $region38: #{tpu_custom_call.1} parent=0
    _
  %s6 = ssub.s32 1, %s4
  %s7 = scalar_select 0, %s6, %s4
  $region1: #{tpu_custom_call.1} parent=0
    #allocation3 [shape = 'u8[8192]{0}', space=vmem, size = 0x2000, scoped, tag = 'input window, operand 0, single buffered']
    #allocation4 [shape = 's32[1]{0}', space=sflag, size = 0x4, scoped, tag = 'scoped memory for tpu_custom_call.1']
    #allocation5 [shape = 's32[1]{0}', space=sflag, size = 0x4, scoped, tag = 'scoped memory for tpu_custom_call.1']
    #allocation6 [shape = 'u8[8192]{0}', space=vmem, size = 0x2000, scoped, tag = 'input window, operand 1, single buffered']
    #allocation7 [shape = 's32[1]{0}', space=sflag, size = 0x4, scoped, tag = 'scoped memory for tpu_custom_call.1']
    #allocation8 [shape = 'u8[8192]{0}', space=vmem, size = 0x2000, scoped, tag = 'output window, operand 0, single buffered']
    %8 = vsyncpa [#allocation4], 0
    %9 = vsyncpa [#allocation7], 0
    %10 = vsyncpa [#allocation5], 0
    // Predicated region
    $region2: #{tpu_custom_call.1} parent=1 // pred_check
      _
    $region3: #{tpu_custom_call.1} parent=1 // pred_check_branch
      %12 = sbr.rel (0) target = $region5
    $region4: #{tpu_custom_call.1} parent=1 // pred_region
      %14 = vsyncadd [#allocation4], 0
      %s15 = sshll.u32 %s0, 4
      %s16 = int_to_ptr.hbm [resolvable:$true] %s15
      %s17 = sshll.u32 [#allocation3], 4
      %s18 = int_to_ptr.vmem [resolvable:$true] %s17
      %23 = dma.hbm_to_vmem [thread:$0]  %s16, 256, %s18, [#allocation4], 128, 128, 8
    $region5: #{tpu_custom_call.1} parent=1 // pred_fallthru
      _
    // Predicated region
    $region6: #{tpu_custom_call.1} parent=1 // pred_check
      _
    $region7: #{tpu_custom_call.1} parent=1 // pred_check_branch
      %25 = sbr.rel (0) target = $region9
    $region8: #{tpu_custom_call.1} parent=1 // pred_region
      %27 = vsyncadd [#allocation7], 0
      %s28 = sshll.u32 %s1, 4
      %s29 = int_to_ptr.hbm [resolvable:$true] %s28
      %s30 = sshll.u32 [#allocation6], 4
      %s31 = int_to_ptr.vmem [resolvable:$true] %s30
      %36 = dma.hbm_to_vmem [thread:$0]  %s29, 256, %s31, [#allocation7], 64, 64, 4
    $region9: #{tpu_custom_call.1} parent=1 // pred_fallthru
      _
    // Predicated region
    $region10: #{tpu_custom_call.1} parent=1 // pred_check
      _
    $region11: #{tpu_custom_call.1} parent=1 // pred_check_branch
      %38 = sbr.rel (0) target = $region13
    $region12: #{tpu_custom_call.1} parent=1 // pred_region
      _
    $region13: #{tpu_custom_call.1} parent=1 // pred_fallthru
      _
    // Predicated region
    $region14: #{tpu_custom_call.1} parent=1 // pred_check
      _
    $region15: #{tpu_custom_call.1} parent=1 // pred_check_branch
      %40 = sbr.rel (0) target = $region17
    $region16: #{tpu_custom_call.1} parent=1 // pred_region
      %42 = dma.done [#allocation4], 256
    $region17: #{tpu_custom_call.1} parent=1 // pred_fallthru
      _
    // Predicated region
    $region18: #{tpu_custom_call.1} parent=1 // pred_check
      _
    $region19: #{tpu_custom_call.1} parent=1 // pred_check_branch
      %44 = sbr.rel (0) target = $region21
    $region20: #{tpu_custom_call.1} parent=1 // pred_region
      %46 = dma.done [#allocation7], 256
    $region21: #{tpu_custom_call.1} parent=1 // pred_fallthru
      _
    %p48 = scmp.eq.s32.totalorder 0, 0
    // Predicated region
    $region22: #{tpu_custom_call.1} parent=1 // pred_check
      %p49 = pneg %p48
    $region23: #{tpu_custom_call.1} parent=1 // pred_check_branch
      %51 = sbr.rel (%p49) target = $region25
    $region24: #{tpu_custom_call.1} parent=1 // pred_region
      %vm52 = vcmask 785408
      %53 = vst.msk [vmem:[#allocation2] sm:$0xff] %vm52, 0.0
      %54 = vst.msk [vmem:[#allocation2 + $0x8] sm:$0xff] %vm52, 0.0
    $region25: #{tpu_custom_call.1} parent=1 // pred_fallthru
      _
    %v55 = vld [vmem:[#allocation2] sm:$0xff]
    %v56 = vld [vmem:[#allocation2 + $0x8] sm:$0xff]
    %v57 = vld [vmem:[#allocation3] sm:$0xff]
    %v58 = vld [vmem:[#allocation3 + $0x8] sm:$0xff]
    %v59 = vpack.c.bf16 %v58, %v57
    %v60 = vld [vmem:[#allocation6] sm:$0xf]
    %v61 = vld [vmem:[#allocation6 + $0x4] sm:$0xf]
    %v62 = vld [vmem:[#allocation6 + $0x8] sm:$0xf]
    %v63 = vld [vmem:[#allocation6 + $0xc] sm:$0xf]
    %v68 = vunpack.c.l.b16 %v60
    %v69 = vunpack.c.l.b16 %v61
    %v70 = vunpack.c.l.b16 %v62
    %v71 = vunpack.c.l.b16 %v63
    %v72 = vpack.c.b16 %v69, %v68
    %v73 = vpack.c.b16 %v71, %v70
    %vm76 = vcmask 261120
    %v78 = vsel %vm76, %v59, 0
    %80 = vmatpush.bf16.msra.mxu0 0
    %81 = vmatpush.bf16.msra.mxu0 0
    %82 = vmatpush.bf16.msra.mxu0 0
    %83 = vmatpush.bf16.msra.mxu0 0
    %84 = vmatpush.bf16.msra.mxu0 0
    %85 = vmatpush.bf16.msra.mxu0 0
    %86 = vmatpush.bf16.msra.mxu0 %v73
    %87 = vmatpush.bf16.msra.mxu0 %v72
    %88 = vmatmul.bf16.gmra.mxu0 %v78
    %v89 = vpop.f32.mrf.mxu0
    %v90 = vadd.f32 0.0, %v89
    %v91 = vpop.f32.mrf.mxu0
    %v92 = vadd.f32 0.0, %v91
    %93 = vdwg.mxu0
    %v94 = vadd.f32 %v55, %v90
    %v95 = vadd.f32 %v56, %v92
    %vm96 = vcmask 785408
    %97 = vst.msk [vmem:[#allocation2] sm:$0xff] %vm96, %v94
    %98 = vst.msk [vmem:[#allocation2 + $0x8] sm:$0xff] %vm96, %v95
    // Predicated region
    $region26: #{tpu_custom_call.1} parent=1 // pred_check
      %p99 = pneg %p48
    $region27: #{tpu_custom_call.1} parent=1 // pred_check_branch
      %101 = sbr.rel (%p99) target = $region29
    $region28: #{tpu_custom_call.1} parent=1 // pred_region
      %v102 = vld [vmem:[#allocation2] sm:$0xff]
      %v103 = vld [vmem:[#allocation2 + $0x8] sm:$0xff]
      %v104 = vld [vmem:[%s2] sm:$0x1]
      %v106 = vperm.slane %v104, 0
      %v108 = vadd.f32 %v102, %v106
      %v109 = vadd.f32 %v103, %v106
      %110 = vst.msk [vmem:[#allocation8] sm:$0xff] %vm96, %v108
      %111 = vst.msk [vmem:[#allocation8 + $0x8] sm:$0xff] %vm96, %v109
    $region29: #{tpu_custom_call.1} parent=1 // pred_fallthru
      _
    // Predicated region
    $region30: #{tpu_custom_call.1} parent=1 // pred_check
      _
    $region31: #{tpu_custom_call.1} parent=1 // pred_check_branch
      %113 = sbr.rel (0) target = $region33
    $region32: #{tpu_custom_call.1} parent=1 // pred_region
      %115 = vsyncadd [#allocation5], 0
      %s116 = sshll.u32 [#allocation8], 4
      %s117 = int_to_ptr.vmem [resolvable:$true] %s116
      %s118 = sshll.u32 %s3, 4
      %s119 = int_to_ptr.hbm [resolvable:$true] %s118
      %124 = dma.vmem_to_hbm [thread:$0]  %s117, 256, %s119, [#allocation5], 128, 128, 8
    $region33: #{tpu_custom_call.1} parent=1 // pred_fallthru
      _
    // Predicated region
    $region34: #{tpu_custom_call.1} parent=1 // pred_check
      _
    $region35: #{tpu_custom_call.1} parent=1 // pred_check_branch
      %126 = sbr.rel (0) target = $region37
    $region36: #{tpu_custom_call.1} parent=1 // pred_region
      %128 = dma.done [#allocation5], 256
    $region37: #{tpu_custom_call.1} parent=1 // pred_fallthru
      _
    %129 = vsyncpa [#allocation4], 1
    %130 = vsyncpa [#allocation7], 1
    %131 = vsyncpa [#allocation5], 1

</llo_original>
